<compile_context>
chip_gen: v7x
topology: tpu7x:2x2x1
jax: 0.10.0
libtpu: 0.0.40
codegen_flags: <defaults>
</compile_context>

<pallas_src>
import jax
import jax.numpy as jnp
from jax.experimental import pallas as pl
from jax.experimental.pallas import tpu as pltpu


def _round_up(x, m):
    return ((x + m - 1) // m) * m


def _vmem_budgets():
    """Generation-aware VMEM budgets (v5e/v6e: 128 MiB physical, v7x: 64 MiB)."""
    try:
        cap = int(pltpu.get_tpu_info().vmem_capacity_bytes)
    except Exception:
        cap = 64 * 1024 * 1024                     # conservative: size for v7x
    vmem_limit = min((cap * 3) // 4, 100 * 1024 * 1024)   # 96 MiB v5e/v6e, 48 MiB v7x
    tile_budget = (vmem_limit * 3) // 4                   # headroom for pipeline/internal
    return vmem_limit, tile_budget


def _choose_tiles(B, S, H, tile_budget):
    """Pick (tb, B_pad, ts, S_pad).

    * tb is a multiple of 8 (sublane rule; also makes the [ts,tb,2H]->[ts*tb,2H]
      collapse layout-free so the enc projection is one big GEMM).
    * When B_pad >= 16 keep at least two batch tiles so the 'parallel' axis can
      be sharded across v7x's two TensorCores.
    * ts (the S chunk) is sized from the VMEM budget, accounting for the
      double-buffered grid-invariant operands (W_h/W_e/b/v), the hidden/output
      blocks and the persistent scratches — not just the enc tile.
    """
    B_pad = _round_up(B, 8)
    cands = [t for t in range(8, B_pad + 1, 8) if B_pad % t == 0]
    usable = [t for t in cands if t <= 256 and (B_pad < 16 or t <= B_pad // 2)]
    tb_list = sorted(usable or [min(cands)], reverse=True)

    s_est = _round_up(S, 8)
    for tb in tb_list:
        fixed = 4 * (2 * (3 * H * H + 2 * H)   # W_h + W_e + b + v, double-buffered
                     + 2 * tb * H              # hidden block (double-buffered)
                     + tb * H                  # hid_term scratch
                     + 3 * tb * s_est)         # out block (x2 bufs) + scores scratch
        per_ts = 4 * tb * (2 * 2 * H           # enc block (double-buffered)
                           + 4 * H             # f32 temps: enc_term / energy / ...
                           + 4)                # score chunk / misc
        avail = tile_budget - fixed
        if avail < per_ts:
            continue                           # this tb does not fit; try a smaller one
        ts = int(min(S, avail // per_ts))
        if ts >= 8:
            ts = (ts // 8) * 8
        if ts >= S:
            ts = S
            # If one S step would still move a large enc tile, split it so the
            # enc DMAs pipeline behind compute even when B_pad // tb == 1.
            if 4 * S * tb * 2 * H > (2 << 20) and S >= 32:
                ts = min(S, max(8, _round_up(-(-S // 4), 8)))
        S_pad = -(-S // ts) * ts
        return tb, B_pad, ts, S_pad

    raise ValueError(
        f"Attention tiles do not fit the VMEM budget (B={B}, S={S}, H={H}, "
        f"budget={tile_budget} bytes); reduce hid_dim or raise the budget.")


def attention_forward(hidden, enc_outputs, w_attn, b_attn, w_v,
                      use_bf16_matmul=False):
    """hidden: [B, H], enc_outputs: [S, B, 2H] -> [B, S] attention weights.

    use_bf16_matmul: cast MXU operands to bf16 (2-4x matmul throughput on
    v6e/v7x).  Off by default: it does not meet the 1e-5 reference tolerance.
    """
    S, B, E2 = enc_outputs.shape
    H = hidden.shape[1]
    assert E2 == 2 * H
    assert w_attn.shape == (H, 3 * H)

    # Split the attn weight: the first H input features act on `hidden`, the
    # remaining 2H on enc_outputs (PyTorch Linear stores [out, in]).  This
    # avoids ever materializing the [B,S,3H] concat / hidden-repeat /
    # enc-transpose in HBM.
    w_t = jnp.transpose(w_attn)            # [3H, H]
    w_h = w_t[:H, :]                       # [H, H]
    w_e = w_t[H:, :]                       # [2H, H]
    b = b_attn.reshape(1, H)
    v = w_v.reshape(1, H)

    vmem_limit, tile_budget = _vmem_budgets()
    tb, B_pad, ts, S_pad = _choose_tiles(B, S, H, tile_budget)
    nb, ns = B_pad // tb, S_pad // ts

    # Zero-pad batch to a multiple of 8 (layout-free (ts, tb) collapse + clean
    # sublane tiling) and S to a multiple of the S chunk.  Padded S rows are
    # masked to -inf before the softmax; padded batch rows are sliced off.
    if B_pad != B:
        hidden = jnp.pad(hidden, ((0, B_pad - B), (0, 0)))
        enc_outputs = jnp.pad(enc_outputs, ((0, 0), (0, B_pad - B), (0, 0)))
    if S_pad != S:
        enc_outputs = jnp.pad(enc_outputs, ((0, S_pad - S), (0, 0), (0, 0)))

    def kernel(hid_ref, enc_ref, wh_ref, we_ref, b_ref, v_ref,
               out_ref, hidterm_ref, scores_ref):
        j = pl.program_id(1)
        n_s = pl.num_programs(1)
        ts_k, tb_k, e2_k = enc_ref.shape
        h_k = hidterm_ref.shape[1]

        # Hidden-side term (independent of S): compute once per batch tile.
        @pl.when(j == 0)
        def _():
            hid = hid_ref[...]
            wh = wh_ref[...]
            if use_bf16_matmul:
                hid, wh = hid.astype(jnp.bfloat16), wh.astype(jnp.bfloat16)
            hidterm_ref[...] = (
                jnp.dot(hid, wh, preferred_element_type=jnp.float32) + b_ref[...])

        # Encoder projection as ONE 2-D GEMM with M = ts*tb (tb % 8 == 0, so the
        # (ts, tb) collapse is layout-free -> no relayout, no ts tiny matmuls).
        enc2d = enc_ref[...].reshape(ts_k * tb_k, e2_k)
        we = we_ref[...]
        if use_bf16_matmul:
            enc2d, we = enc2d.astype(jnp.bfloat16), we.astype(jnp.bfloat16)
        enc_term = jnp.dot(enc2d, we, preferred_element_type=jnp.float32)
        enc_term = enc_term.reshape(ts_k, tb_k, h_k)

        # For moderate H the single EUP (tanh over ts*tb*H elems) is the binding
        # unit; the v-projection (VPU mul + XLU lane reduce) and softmax are
        # filler under it, so no MXU fallback for the reduction is needed.
        energy = jnp.tanh(enc_term + hidterm_ref[...][None, :, :])      # [ts,tb,H]
        score = jnp.sum(energy * v_ref[...][None, :, :], axis=-1)       # [ts,tb]

        start = j * ts_k
        if ts_k % 8 == 0:
            start = pl.multiple_of(start, 8)
        scores_ref[pl.ds(start, ts_k), :] = score

        # Softmax over S + single output store, once per batch tile.
        @pl.when(j == n_s - 1)
        def _():
            sc = scores_ref[...]                                        # [S_pad, tb]
            if S_pad > S:   # static trace-time branch: mask padded positions
                row = jax.lax.broadcasted_iota(jnp.int32, (S_pad, tb_k), 0)
                sc = jnp.where(row < S, sc, -jnp.inf)
            m = jnp.max(sc, axis=0, keepdims=True)
            e = jnp.exp(sc - m)
            inv = pl.reciprocal(jnp.sum(e, axis=0, keepdims=True), approx=False)
            probs = e * inv                                             # [S_pad, tb]
            # One small [S_pad, tb] -> [tb, S_pad] transpose per batch tile;
            # output traffic is ~1/(2H) of the enc reads, so this keeps the
            # natural [B, S] output while leaving tb free of the 128-lane rule.
            out_ref[...] = jnp.transpose(probs).astype(out_ref.dtype)

    out = pl.pallas_call(
        kernel,
        out_shape=jax.ShapeDtypeStruct((B_pad, S_pad), jnp.float32),
        grid=(nb, ns),
        in_specs=[
            pl.BlockSpec((tb, H), lambda i, j: (i, 0)),             # hidden
            pl.BlockSpec((ts, tb, 2 * H), lambda i, j: (j, i, 0)),  # enc (seq-major)
            pl.BlockSpec((H, H), lambda i, j: (0, 0)),              # W_h (invariant)
            pl.BlockSpec((2 * H, H), lambda i, j: (0, 0)),          # W_e (invariant)
            pl.BlockSpec((1, H), lambda i, j: (0, 0)),              # bias
            pl.BlockSpec((1, H), lambda i, j: (0, 0)),              # v
        ],
        out_specs=pl.BlockSpec((tb, S_pad), lambda i, j: (i, 0)),
        scratch_shapes=[
            pltpu.VMEM((tb, H), jnp.float32),        # hid_term, hoisted over S
            pltpu.VMEM((S_pad, tb), jnp.float32),    # scores, persistent over S steps
        ],
        compiler_params=pltpu.CompilerParams(
            dimension_semantics=("parallel", "arbitrary"),
            vmem_limit_bytes=vmem_limit,
        ),
    )(hidden, enc_outputs, w_h, w_e, b, v)

    return out[:B, :S]


def attention_reference(hidden, enc_outputs, w_attn, b_attn, w_v):
    """Pure-JAX reference mirroring the PyTorch forward."""
    S, B, _ = enc_outputs.shape
    H = hidden.shape[1]
    hid_rep = jnp.broadcast_to(hidden[:, None, :], (B, S, H))
    enc_bm = jnp.transpose(enc_outputs, (1, 0, 2))
    cat = jnp.concatenate([hid_rep, enc_bm], axis=-1)
    energy = jnp.tanh(jnp.einsum("bsk,hk->bsh", cat, w_attn) + b_attn)
    attention = jnp.einsum("bsh,oh->bso", energy, w_v)[..., 0]
    return jax.nn.softmax(attention, axis=1)


if __name__ == "__main__":
    B, S, H = 2, 8, 32  # batch, src_len, hid_dim

    key = jax.random.PRNGKey(0)
    k_h, k_e, k_w, k_b, k_v = jax.random.split(key, 5)

    hidden = jax.random.normal(k_h, (B, H), dtype=jnp.float32)
    enc_outputs = jax.random.normal(k_e, (S, B, 2 * H), dtype=jnp.float32)

    # Deterministic parameter init (nn.Linear-style uniform bounds).
    bound_attn = 1.0 / jnp.sqrt(3.0 * H)
    w_attn = jax.random.uniform(k_w, (H, 3 * H), jnp.float32,
                                -bound_attn, bound_attn)
    b_attn = jax.random.uniform(k_b, (H,), jnp.float32,
                                -bound_attn, bound_attn)
    bound_v = 1.0 / jnp.sqrt(float(H))
    w_v = jax.random.uniform(k_v, (1, H), jnp.float32, -bound_v, bound_v)

    out = attention_forward(hidden, enc_outputs, w_attn, b_attn, w_v)
    out = jax.block_until_ready(out)

    ref = attention_reference(hidden, enc_outputs, w_attn, b_attn, w_v)
    assert out.shape == (B, S)
    assert jnp.allclose(out, ref, atol=1e-5, rtol=1e-5)
    assert jnp.allclose(jnp.sum(out, axis=1), jnp.ones((B,)), atol=1e-5)

    print("KERNEL_OK")
</pallas_src>

<mosaic_0001>
module attributes {stable_mosaic.version = 11 : i64} {
  func.func @kernel(%arg0: i32, %arg1: i32, %arg2: memref<8x32xf32, #tpu.memory_space<vmem>>, %arg3: memref<8x8x64xf32, #tpu.memory_space<vmem>>, %arg4: memref<32x32xf32, #tpu.memory_space<vmem>>, %arg5: memref<64x32xf32, #tpu.memory_space<vmem>>, %arg6: memref<1x32xf32, #tpu.memory_space<vmem>>, %arg7: memref<1x32xf32, #tpu.memory_space<vmem>>, %arg8: memref<8x8xf32, #tpu.memory_space<vmem>>, %arg9: memref<8x32xf32, #tpu.memory_space<vmem>>, %arg10: memref<8x8xf32, #tpu.memory_space<vmem>>) attributes {dimension_semantics = [#tpu.dimension_semantics<parallel>, #tpu.dimension_semantics<arbitrary>], iteration_bounds = array<i64: 1, 1>, scalar_prefetch = 0 : i64, scratch_operands = 2 : i64, tpu.core_type = #tpu.core_type<tc>, window_params = [{transform_indices = @transform_0, window_bounds = array<i64: 8, 32>}, {transform_indices = @transform_1, window_bounds = array<i64: 8, 8, 64>}, {pipeline_mode = #tpu.pipeline_mode<synchronous>, transform_indices = @transform_2, window_bounds = array<i64: 32, 32>}, {pipeline_mode = #tpu.pipeline_mode<synchronous>, transform_indices = @transform_3, window_bounds = array<i64: 64, 32>}, {pipeline_mode = #tpu.pipeline_mode<synchronous>, transform_indices = @transform_4, window_bounds = array<i64: 1, 32>}, {pipeline_mode = #tpu.pipeline_mode<synchronous>, transform_indices = @transform_5, window_bounds = array<i64: 1, 32>}, {transform_indices = @transform_6, window_bounds = array<i64: 8, 8>}]} {
    %c0_i32 = arith.constant 0 : i32
    %0 = arith.cmpi eq, %arg1, %c0_i32 : i32
    %1 = arith.extui %0 : i1 to i32
    %c0_i32_0 = arith.constant 0 : i32
    %2 = arith.cmpi ne, %1, %c0_i32_0 : i32
    scf.if %2 {
      %c0_13 = arith.constant 0 : index
      %c0_14 = arith.constant 0 : index
      %25 = vector.load %arg2[%c0_13, %c0_14] : memref<8x32xf32, #tpu.memory_space<vmem>>, vector<8x32xf32>
      %c0_15 = arith.constant 0 : index
      %c0_16 = arith.constant 0 : index
      %26 = vector.load %arg4[%c0_15, %c0_16] : memref<32x32xf32, #tpu.memory_space<vmem>>, vector<32x32xf32>
      %cst_17 = arith.constant dense<0.000000e+00> : vector<8x32xf32>
      %27 = tpu.matmul %25, %26, %cst_17 {dimension_numbers = #tpu.dot_dimension_numbers<[1], [0], [0], [1], [0, 0, 1, 1], [], []>} : vector<8x32xf32>, vector<32x32xf32>, vector<8x32xf32> -> vector<8x32xf32>
      %c0_18 = arith.constant 0 : index
      %c0_19 = arith.constant 0 : index
      %28 = vector.load %arg6[%c0_18, %c0_19] : memref<1x32xf32, #tpu.memory_space<vmem>>, vector<1x32xf32>
      %29 = vector.broadcast %28 : vector<1x32xf32> to vector<8x32xf32>
      %30 = arith.addf %27, %29 : vector<8x32xf32>
      %c0_20 = arith.constant 0 : index
      %c0_21 = arith.constant 0 : index
      %31 = vector.load %arg9[%c0_20, %c0_21] : memref<8x32xf32, #tpu.memory_space<vmem>>, vector<8x32xf32>
      tpu.vector_store %arg9[%c0_20, %c0_21], %30 {strides = array<i32>} : memref<8x32xf32, #tpu.memory_space<vmem>>, vector<8x32xf32>,
    } else {
    }
    %c0 = arith.constant 0 : index
    %c0_1 = arith.constant 0 : index
    %c0_2 = arith.constant 0 : index
    %3 = vector.load %arg3[%c0, %c0_1, %c0_2] : memref<8x8x64xf32, #tpu.memory_space<vmem>>, vector<8x8x64xf32>
    %4 = vector.shape_cast %3 : vector<8x8x64xf32> to vector<64x64xf32>
    %c0_3 = arith.constant 0 : index
    %c0_4 = arith.constant 0 : index
    %5 = vector.load %arg5[%c0_3, %c0_4] : memref<64x32xf32, #tpu.memory_space<vmem>>, vector<64x32xf32>
    %cst = arith.constant dense<0.000000e+00> : vector<64x32xf32>
    %6 = tpu.matmul %4, %5, %cst {dimension_numbers = #tpu.dot_dimension_numbers<[1], [0], [0], [1], [0, 0, 1, 1], [], []>} : vector<64x64xf32>, vector<64x32xf32>, vector<64x32xf32> -> vector<64x32xf32>
    %7 = vector.shape_cast %6 : vector<64x32xf32> to vector<8x8x32xf32>
    %c0_5 = arith.constant 0 : index
    %c0_6 = arith.constant 0 : index
    %8 = vector.load %arg9[%c0_5, %c0_6] : memref<8x32xf32, #tpu.memory_space<vmem>>, vector<8x32xf32>
    %9 = vector.shape_cast %8 : vector<8x32xf32> to vector<1x8x32xf32>
    %10 = vector.broadcast %9 : vector<1x8x32xf32> to vector<8x8x32xf32>
    %11 = arith.addf %7, %10 : vector<8x8x32xf32>
    %12 = math.tanh %11 : vector<8x8x32xf32>
    %c0_7 = arith.constant 0 : index
    %c0_8 = arith.constant 0 : index
    %13 = vector.load %arg7[%c0_7, %c0_8] : memref<1x32xf32, #tpu.memory_space<vmem>>, vector<1x32xf32>
    %14 = vector.shape_cast %13 : vector<1x32xf32> to vector<1x1x32xf32>
    %15 = vector.broadcast %14 : vector<1x1x32xf32> to vector<8x8x32xf32>
    %16 = arith.mulf %12, %15 : vector<8x8x32xf32>
    %cst_9 = arith.constant dense<0.000000e+00> : vector<8x8xf32>
    %17 = vector.multi_reduction <add>, %16, %cst_9 [2] : vector<8x8x32xf32> to vector<8x8xf32>
    %c8_i32 = arith.constant 8 : i32
    %18 = arith.muli %arg1, %c8_i32 : i32
    %19 = tpu.assume_multiple %18, 8 : i32
    %20 = arith.index_cast %19 : i32 to index
    %c0_10 = arith.constant 0 : index
    %21 = vector.load %arg10[%20, %c0_10] : memref<8x8xf32, #tpu.memory_space<vmem>>, vector<8x8xf32>
    tpu.vector_store %arg10[%20, %c0_10], %17 {strides = array<i32>} : memref<8x8xf32, #tpu.memory_space<vmem>>, vector<8x8xf32>,
    %c0_i32_11 = arith.constant 0 : i32
    %22 = arith.cmpi eq, %arg1, %c0_i32_11 : i32
    %23 = arith.extui %22 : i1 to i32
    %c0_i32_12 = arith.constant 0 : i32
    %24 = arith.cmpi ne, %23, %c0_i32_12 : i32
    scf.if %24 {
      %c0_13 = arith.constant 0 : index
      %c0_14 = arith.constant 0 : index
      %25 = vector.load %arg10[%c0_13, %c0_14] : memref<8x8xf32, #tpu.memory_space<vmem>>, vector<8x8xf32>
      %cst_15 = arith.constant dense<0xFF800000> : vector<8xf32>
      %26 = vector.multi_reduction <maximumf>, %25, %cst_15 [0] : vector<8x8xf32> to vector<8xf32>
      %27 = vector.shape_cast %26 : vector<8xf32> to vector<1x8xf32>
      %28 = vector.broadcast %27 : vector<1x8xf32> to vector<8x8xf32>
      %29 = arith.subf %25, %28 : vector<8x8xf32>
      %30 = math.exp %29 : vector<8x8xf32>
      %cst_16 = arith.constant dense<0.000000e+00> : vector<8xf32>
      %31 = vector.multi_reduction <add>, %30, %cst_16 [0] : vector<8x8xf32> to vector<8xf32>
      %32 = vector.shape_cast %31 : vector<8xf32> to vector<1x8xf32>
      %33 = tpu.reciprocal %32 : vector<1x8xf32> -> vector<1x8xf32>
      %34 = vector.broadcast %33 : vector<1x8xf32> to vector<8x8xf32>
      %35 = arith.mulf %30, %34 : vector<8x8xf32>
      %36 = tpu.transpose %35, [1, 0] : vector<8x8xf32> -> vector<8x8xf32>
      %c0_17 = arith.constant 0 : index
      %c0_18 = arith.constant 0 : index
      %37 = vector.load %arg8[%c0_17, %c0_18] : memref<8x8xf32, #tpu.memory_space<vmem>>, vector<8x8xf32>
      tpu.vector_store %arg8[%c0_17, %c0_18], %36 {strides = array<i32>} : memref<8x8xf32, #tpu.memory_space<vmem>>, vector<8x8xf32>,
    } else {
    }
    return
  }
  func.func @transform_0(%arg0: i32, %arg1: i32) -> (i32, i32) {
    %c0_i32 = arith.constant 0 : i32
    %c0_i32_0 = arith.constant 0 : i32
    return %arg0, %c0_i32 : i32, i32
  }
  func.func @transform_1(%arg0: i32, %arg1: i32) -> (i32, i32, i32) {
    %c0_i32 = arith.constant 0 : i32
    %c0_i32_0 = arith.constant 0 : i32
    return %arg1, %arg0, %c0_i32 : i32, i32, i32
  }
  func.func @transform_2(%arg0: i32, %arg1: i32) -> (i32, i32) {
    %c0_i32 = arith.constant 0 : i32
    %c0_i32_0 = arith.constant 0 : i32
    %c0_i32_1 = arith.constant 0 : i32
    return %c0_i32, %c0_i32_0 : i32, i32
  }
  func.func @transform_3(%arg0: i32, %arg1: i32) -> (i32, i32) {
    %c0_i32 = arith.constant 0 : i32
    %c0_i32_0 = arith.constant 0 : i32
    %c0_i32_1 = arith.constant 0 : i32
    return %c0_i32, %c0_i32_0 : i32, i32
  }
  func.func @transform_4(%arg0: i32, %arg1: i32) -> (i32, i32) {
    %c0_i32 = arith.constant 0 : i32
    %c0_i32_0 = arith.constant 0 : i32
    %c0_i32_1 = arith.constant 0 : i32
    return %c0_i32, %c0_i32_0 : i32, i32
  }
  func.func @transform_5(%arg0: i32, %arg1: i32) -> (i32, i32) {
    %c0_i32 = arith.constant 0 : i32
    %c0_i32_0 = arith.constant 0 : i32
    %c0_i32_1 = arith.constant 0 : i32
    return %c0_i32, %c0_i32_0 : i32, i32
  }
  func.func @transform_6(%arg0: i32, %arg1: i32) -> (i32, i32) {
    %c0_i32 = arith.constant 0 : i32
    %c0_i32_0 = arith.constant 0 : i32
    return %arg0, %c0_i32 : i32, i32
  }
}

</mosaic_0001>

<llo_original>
// kernel: tpu_custom_call.1
$region0: #{tpu_custom_call.1}
  #allocation0 [shape = 'u32[]', space=smem, size = 0x4, offset = 0x4, fixed_abs, tag = 'smem constant byte address 0x4 - core index']
  #allocation1 [shape = 'u32[144,128]{1,0:T(1,128)}', space=vmem, size = 0x12000, scoped, tag = 'internal scratch']
  #allocation2 [shape = 'f32[8,32]{1,0:T(8,128)}', space=vmem, size = 0x1000, scoped, tag = 'scratch operand']
  #allocation3 [shape = 'f32[8,8]{1,0:T(8,128)}', space=vmem, size = 0x1000, scoped, tag = 'scratch operand']
  %s0 = inlined_call_operand.hbm [shape: f32[8,32], index: 0, kind: input, shape index: {}]
  %s1 = inlined_call_operand.vmem [shape: f32[8,8,64], index: 1, kind: input, shape index: {}]
  %s2 = inlined_call_operand.vmem [shape: f32[32,32], index: 2, kind: input, shape index: {}]
  %s3 = inlined_call_operand.vmem [shape: f32[64,32], index: 3, kind: input, shape index: {}]
  %s4 = inlined_call_operand.vmem [shape: f32[1,32], index: 4, kind: input, shape index: {}]
  %s5 = inlined_call_operand.vmem [shape: f32[1,32], index: 5, kind: input, shape index: {}]
  %s6 = inlined_call_operand.hbm [shape: f32[8,8], index: 6, kind: output, shape index: {}]
  %s7 = sld [smem:[#allocation0]]
  $region46: #{tpu_custom_call.1} parent=0
    _
  %s9 = ssub.s32 1, %s7
  %s10 = scalar_select 0, %s9, %s7
  $region1: #{tpu_custom_call.1} parent=0
    #allocation4 [shape = 'u8[4096]{0}', space=vmem, size = 0x1000, scoped, tag = 'input window, operand 0, single buffered']
    #allocation5 [shape = 's32[1]{0}', space=sflag, size = 0x4, scoped, tag = 'scoped memory for tpu_custom_call.1']
    #allocation6 [shape = 's32[1]{0}', space=sflag, size = 0x4, scoped, tag = 'scoped memory for tpu_custom_call.1']
    #allocation7 [shape = 'u8[4096]{0}', space=vmem, size = 0x1000, scoped, tag = 'output window, operand 0, single buffered']
    %11 = vsyncpa [#allocation5], 0
    %12 = vsyncpa [#allocation6], 0
    // Predicated region
    $region2: #{tpu_custom_call.1} parent=1 // pred_check
      _
    $region3: #{tpu_custom_call.1} parent=1 // pred_check_branch
      %14 = sbr.rel (0) target = $region5
    $region4: #{tpu_custom_call.1} parent=1 // pred_region
      %s16 = ssub.s32 128, 128
      %17 = vsyncadd [#allocation5], %s16
      %s19 = sshll.u32 [#allocation4], 4
      %s20 = int_to_ptr.vmem [resolvable:$true] %s19
      %22 = dma.hbm_to_vmem [thread:$0]  %s0, 128, %s20, [#allocation5]
    $region5: #{tpu_custom_call.1} parent=1 // pred_fallthru
      _
    // Predicated region
    $region6: #{tpu_custom_call.1} parent=1 // pred_check
      _
    $region7: #{tpu_custom_call.1} parent=1 // pred_check_branch
      %24 = sbr.rel (0) target = $region9
    $region8: #{tpu_custom_call.1} parent=1 // pred_region
      _
    $region9: #{tpu_custom_call.1} parent=1 // pred_fallthru
      _
    // Predicated region
    $region10: #{tpu_custom_call.1} parent=1 // pred_check
      _
    $region11: #{tpu_custom_call.1} parent=1 // pred_check_branch
      %26 = sbr.rel (0) target = $region13
    $region12: #{tpu_custom_call.1} parent=1 // pred_region
      _
    $region13: #{tpu_custom_call.1} parent=1 // pred_fallthru
      _
    // Predicated region
    $region14: #{tpu_custom_call.1} parent=1 // pred_check
      _
    $region15: #{tpu_custom_call.1} parent=1 // pred_check_branch
      %28 = sbr.rel (0) target = $region17
    $region16: #{tpu_custom_call.1} parent=1 // pred_region
      _
    $region17: #{tpu_custom_call.1} parent=1 // pred_fallthru
      _
    // Predicated region
    $region18: #{tpu_custom_call.1} parent=1 // pred_check
      _
    $region19: #{tpu_custom_call.1} parent=1 // pred_check_branch
      %30 = sbr.rel (0) target = $region21
    $region20: #{tpu_custom_call.1} parent=1 // pred_region
      _
    $region21: #{tpu_custom_call.1} parent=1 // pred_fallthru
      _
    // Predicated region
    $region22: #{tpu_custom_call.1} parent=1 // pred_check
      _
    $region23: #{tpu_custom_call.1} parent=1 // pred_check_branch
      %32 = sbr.rel (0) target = $region25
    $region24: #{tpu_custom_call.1} parent=1 // pred_region
      _
    $region25: #{tpu_custom_call.1} parent=1 // pred_fallthru
      _
    // Predicated region
    $region26: #{tpu_custom_call.1} parent=1 // pred_check
      _
    $region27: #{tpu_custom_call.1} parent=1 // pred_check_branch
      %34 = sbr.rel (0) target = $region29
    $region28: #{tpu_custom_call.1} parent=1 // pred_region
      %35 = dma.done [#allocation5], 128
    $region29: #{tpu_custom_call.1} parent=1 // pred_fallthru
      _
    %p36 = scmp.eq.s32.totalorder 0, 0
    // Predicated region
    $region30: #{tpu_custom_call.1} parent=1 // pred_check
      %p37 = pneg %p36
    $region31: #{tpu_custom_call.1} parent=1 // pred_check_branch
      %39 = sbr.rel (%p37) target = $region33
    $region32: #{tpu_custom_call.1} parent=1 // pred_region
      %v40 = vld [vmem:[#allocation4] sm:$0xff]
      %v41 = vld [vmem:[%s2] sm:$0xff]
      %v42 = vld [vmem:[%s2 + $0x8] sm:$0xff]
      %v43 = vld [vmem:[%s2 + $0x10] sm:$0xff]
      %v44 = vld [vmem:[%s2 + $0x18] sm:$0xff]
      %v45 = vld [vmem:[%s4] sm:$0x1]
      %v47 = vlaneseq
      %v48 = vshrl.u32 %v47, 7
      %v49 = vsub.s32 0, %v48
      %v50 = vrot.slane %v45, %v49
      %vm52 = vcmask 261120
      %v54 = vsel %vm52, %v40, 0
      %56 = vmatprep.subr.mxu0 0.0
      %57 = vmatpush1.msra.mxu0 %v41
      %58 = vmatprep.subr.mxu0 0.0
      %59 = vmatpush1.msra.mxu0 %v42
      %60 = vmatprep.subr.mxu0 0.0
      %61 = vmatpush1.msra.mxu0 %v43
      %62 = vmatprep.subr.mxu0 0.0
      %63 = vmatpush1.msra.mxu0 %v44
      %64 = vmatprep.subr.mxu0 0.0
      %65 = vmatpush1.msra.mxu0 0.0
      %66 = vmatprep.subr.mxu0 0.0
      %67 = vmatpush1.msra.mxu0 0.0
      %68 = vmatprep.subr.mxu0 0.0
      %69 = vmatpush1.msra.mxu0 0.0
      %70 = vmatprep.subr.mxu0 0.0
      %71 = vmatpush1.msra.mxu0 0.0
      %72 = vmatprep.subr.mxu0 0.0
      %73 = vmatpush1.msra.mxu0 0.0
      %74 = vmatprep.subr.mxu0 0.0
      %75 = vmatpush1.msra.mxu0 0.0
      %76 = vmatprep.subr.mxu0 0.0
      %77 = vmatpush1.msra.mxu0 0.0
      %78 = vmatprep.subr.mxu0 0.0
      %79 = vmatpush1.msra.mxu0 0.0
      %80 = vmatprep.subr.mxu0 0.0
      %81 = vmatpush1.msra.mxu0 0.0
      %82 = vmatprep.subr.mxu0 0.0
      %83 = vmatpush1.msra.mxu0 0.0
      %84 = vmatprep.subr.mxu0 0.0
      %85 = vmatpush1.msra.mxu0 0.0
      %86 = vmatprep.subr.mxu0 0.0
      %87 = vmatpush1.msra.mxu0 0.0
      %88 = vmatprep.subr.mxu0 0.0
      %89 = vmatpush1.msra.mxu0 0.0
      %90 = vmatprep.subr.mxu0 0.0
      %91 = vmatpush1.msra.mxu0 0.0
      %92 = vmatprep.subr.mxu0 0.0
      %93 = vmatpush1.msra.mxu0 0.0
      %94 = vmatprep.subr.mxu0 0.0
      %95 = vmatpush1.msra.mxu0 0.0
      %96 = vmatprep.subr.mxu0 0.0
      %97 = vmatpush1.msra.mxu0 0.0
      %98 = vmatprep.subr.mxu0 0.0
      %99 = vmatpush1.msra.mxu0 0.0
      %100 = vmatprep.subr.mxu0 0.0
      %101 = vmatpush1.msra.mxu0 0.0
      %102 = vmatprep.subr.mxu0 0.0
      %103 = vmatpush1.msra.mxu0 0.0
      %104 = vmatprep.subr.mxu0 0.0
      %105 = vmatpush1.msra.mxu0 0.0
      %106 = vmatprep.subr.mxu0 0.0
      %107 = vmatpush1.msra.mxu0 0.0
      %108 = vmatprep.subr.mxu0 0.0
      %109 = vmatpush1.msra.mxu0 0.0
      %110 = vmatprep.subr.mxu0 0.0
      %111 = vmatpush1.msra.mxu0 0.0
      %112 = vmatprep.subr.mxu0 0.0
      %113 = vmatpush1.msra.mxu0 0.0
      %114 = vmatprep.subr.mxu0 0.0
      %115 = vmatpush1.msra.mxu0 0.0
      %116 = vmatprep.subr.mxu0 0.0
      %117 = vmatpush1.msra.mxu0 0.0
      %118 = vmatprep.subr.mxu0 0.0
      %119 = vmatpush1.msra.mxu0 0.0
      %120 = vmatprep.mubr.f32.mxu0 0.0
      %121 = vmatmul.mubr.f32.gmra.mrb[0].mxu0 %v54
      %v122 = vpop.f32.mrb[0].mxu0
      %v123 = vadd.f32 %v50, %v122
      %v124 = vpop.f32.mrb[0].mxu0
      %125 = vdwg.mxu0
      %126 = vst.msk [vmem:[#allocation2] sm:$0xff] %vm52, %v123
    $region33: #{tpu_custom_call.1} parent=1 // pred_fallthru
      _
    %v127 = vld [vmem:[%s1] sm:$0xff]
    %v128 = vld [vmem:[%s1 + $0x8] sm:$0xff]
    %v129 = vld [vmem:[%s1 + $0x10] sm:$0xff]
    %v130 = vld [vmem:[%s1 + $0x18] sm:$0xff]
    %v131 = vld [vmem:[%s1 + $0x20] sm:$0xff]
    %v132 = vld [vmem:[%s1 + $0x28] sm:$0xff]
    %v133 = vld [vmem:[%s1 + $0x30] sm:$0xff]
    %v134 = vld [vmem:[%s1 + $0x38] sm:$0xff]
    %v135 = vld [vmem:[%s3] sm:$0xff]
    %v136 = vld [vmem:[%s3 + $0x8] sm:$0xff]
    %v137 = vld [vmem:[%s3 + $0x10] sm:$0xff]
    %v138 = vld [vmem:[%s3 + $0x18] sm:$0xff]
    %v139 = vld [vmem:[%s3 + $0x20] sm:$0xff]
    %v140 = vld [vmem:[%s3 + $0x28] sm:$0xff]
    %v141 = vld [vmem:[%s3 + $0x30] sm:$0xff]
    %v142 = vld [vmem:[%s3 + $0x38] sm:$0xff]
    %vm143 = vcmask 523264
    %v145 = vsel %vm143, %v127, 0
    %v148 = vsel %vm143, %v128, 0
    %v151 = vsel %vm143, %v129, 0
    %v154 = vsel %vm143, %v130, 0
    %v157 = vsel %vm143, %v131, 0
    %v160 = vsel %vm143, %v132, 0
    %v163 = vsel %vm143, %v133, 0
    %v166 = vsel %vm143, %v134, 0
    %168 = vmatprep.subr.mxu0 0.0
    %169 = vmatpush1.msra.mxu0 %v135
    %170 = vmatprep.subr.mxu0 0.0
    %171 = vmatpush1.msra.mxu0 %v136
    %172 = vmatprep.subr.mxu0 0.0
    %173 = vmatpush1.msra.mxu0 %v137
    %174 = vmatprep.subr.mxu0 0.0
    %175 = vmatpush1.msra.mxu0 %v138
    %176 = vmatprep.subr.mxu0 0.0
    %177 = vmatpush1.msra.mxu0 %v139
    %178 = vmatprep.subr.mxu0 0.0
    %179 = vmatpush1.msra.mxu0 %v140
    %180 = vmatprep.subr.mxu0 0.0
    %181 = vmatpush1.msra.mxu0 %v141
    %182 = vmatprep.subr.mxu0 0.0
    %183 = vmatpush1.msra.mxu0 %v142
    %184 = vmatprep.subr.mxu0 0.0
    %185 = vmatpush1.msra.mxu0 0.0
    %186 = vmatprep.subr.mxu0 0.0
    %187 = vmatpush1.msra.mxu0 0.0
    %188 = vmatprep.subr.mxu0 0.0
    %189 = vmatpush1.msra.mxu0 0.0
    %190 = vmatprep.subr.mxu0 0.0
    %191 = vmatpush1.msra.mxu0 0.0
    %192 = vmatprep.subr.mxu0 0.0
    %193 = vmatpush1.msra.mxu0 0.0
    %194 = vmatprep.subr.mxu0 0.0
    %195 = vmatpush1.msra.mxu0 0.0
    %196 = vmatprep.subr.mxu0 0.0
    %197 = vmatpush1.msra.mxu0 0.0
    %198 = vmatprep.subr.mxu0 0.0
    %199 = vmatpush1.msra.mxu0 0.0
    %200 = vmatprep.subr.mxu0 0.0
    %201 = vmatpush1.msra.mxu0 0.0
    %202 = vmatprep.subr.mxu0 0.0
    %203 = vmatpush1.msra.mxu0 0.0
    %204 = vmatprep.subr.mxu0 0.0
    %205 = vmatpush1.msra.mxu0 0.0
    %206 = vmatprep.subr.mxu0 0.0
    %207 = vmatpush1.msra.mxu0 0.0
    %208 = vmatprep.subr.mxu0 0.0
    %209 = vmatpush1.msra.mxu0 0.0
    %210 = vmatprep.subr.mxu0 0.0
    %211 = vmatpush1.msra.mxu0 0.0
    %212 = vmatprep.subr.mxu0 0.0
    %213 = vmatpush1.msra.mxu0 0.0
    %214 = vmatprep.subr.mxu0 0.0
    %215 = vmatpush1.msra.mxu0 0.0
    %216 = vmatprep.subr.mxu0 0.0
    %217 = vmatpush1.msra.mxu0 0.0
    %218 = vmatprep.subr.mxu0 0.0
    %219 = vmatpush1.msra.mxu0 0.0
    %220 = vmatprep.subr.mxu0 0.0
    %221 = vmatpush1.msra.mxu0 0.0
    %222 = vmatprep.subr.mxu0 0.0
    %223 = vmatpush1.msra.mxu0 0.0
    %224 = vmatprep.subr.mxu0 0.0
    %225 = vmatpush1.msra.mxu0 0.0
    %226 = vmatprep.subr.mxu0 0.0
    %227 = vmatpush1.msra.mxu0 0.0
    %228 = vmatprep.subr.mxu0 0.0
    %229 = vmatpush1.msra.mxu0 0.0
    %230 = vmatprep.subr.mxu0 0.0
    %231 = vmatpush1.msra.mxu0 0.0
    %232 = vmatprep.mubr.f32.mxu0 0.0
    %233 = vmatmul.mubr.f32.gmra.mrb[0].mxu0 %v145
    %v234 = vpop.f32.mrb[0].mxu0
    %v235 = vadd.f32 0.0, %v234
    %v236 = vpop.f32.mrb[0].mxu0
    %237 = vmatprep.mubr.f32.mxu0 0.0
    %238 = vmatmul.mubr.f32.gmra.mrb[0].mxu0 %v148
    %v239 = vpop.f32.mrb[0].mxu0
    %v240 = vadd.f32 0.0, %v239
    %v241 = vpop.f32.mrb[0].mxu0
    %242 = vmatprep.mubr.f32.mxu0 0.0
    %243 = vmatmul.mubr.f32.gmra.mrb[0].mxu0 %v151
    %v244 = vpop.f32.mrb[0].mxu0
    %v245 = vadd.f32 0.0, %v244
    %v246 = vpop.f32.mrb[0].mxu0
    %247 = vmatprep.mubr.f32.mxu0 0.0
    %248 = vmatmul.mubr.f32.gmra.mrb[0].mxu0 %v154
    %v249 = vpop.f32.mrb[0].mxu0
    %v250 = vadd.f32 0.0, %v249
    %v251 = vpop.f32.mrb[0].mxu0
    %252 = vmatprep.mubr.f32.mxu0 0.0
    %253 = vmatmul.mubr.f32.gmra.mrb[0].mxu0 %v157
    %v254 = vpop.f32.mrb[0].mxu0
    %v255 = vadd.f32 0.0, %v254
    %v256 = vpop.f32.mrb[0].mxu0
    %257 = vmatprep.mubr.f32.mxu0 0.0
    %258 = vmatmul.mubr.f32.gmra.mrb[0].mxu0 %v160
    %v259 = vpop.f32.mrb[0].mxu0
    %v260 = vadd.f32 0.0, %v259
    %v261 = vpop.f32.mrb[0].mxu0
    %262 = vmatprep.mubr.f32.mxu0 0.0
    %263 = vmatmul.mubr.f32.gmra.mrb[0].mxu0 %v163
    %v264 = vpop.f32.mrb[0].mxu0
    %v265 = vadd.f32 0.0, %v264
    %v266 = vpop.f32.mrb[0].mxu0
    %267 = vmatprep.mubr.f32.mxu0 0.0
    %268 = vmatmul.mubr.f32.gmra.mrb[0].mxu0 %v166
    %v269 = vpop.f32.mrb[0].mxu0
    %v270 = vadd.f32 0.0, %v269
    %v271 = vpop.f32.mrb[0].mxu0
    %272 = vdwg.mxu0
    %v273 = vld [vmem:[#allocation2] sm:$0xff]
    %v274 = vadd.f32 %v235, %v273
    %v275 = vadd.f32 %v240, %v273
    %v276 = vadd.f32 %v245, %v273
    %v277 = vadd.f32 %v250, %v273
    %v278 = vadd.f32 %v255, %v273
    %v279 = vadd.f32 %v260, %v273
    %v280 = vadd.f32 %v265, %v273
    %v281 = vadd.f32 %v270, %v273
    %v282 = vtanh.pop %v274
    %v283 = vtanh.pop %v275
    %v284 = vtanh.pop %v276
    %v285 = vtanh.pop %v277
    %v286 = vtanh.pop %v278
    %v287 = vtanh.pop %v279
    %v288 = vtanh.pop %v280
    %v289 = vtanh.pop %v281
    %v290 = vld [vmem:[%s5] sm:$0x1]
    %v292 = vlaneseq
    %v293 = vshrl.u32 %v292, 7
    %v294 = vsub.s32 0, %v293
    %v295 = vrot.slane %v290, %v294
    %v297 = vmul.f32 %v282, %v295
    %v298 = vmul.f32 %v283, %v295
    %v299 = vmul.f32 %v284, %v295
    %v300 = vmul.f32 %v285, %v295
    %v301 = vmul.f32 %v286, %v295
    %v302 = vmul.f32 %v287, %v295
    %v303 = vmul.f32 %v288, %v295
    %v304 = vmul.f32 %v289, %v295
    %vm305 = vcmask 261120
    %v306 = vsel %vm305, %v297, 0.0
    %307 = vadd.xlane.f32.xlu0 %v306
    %v308 = vpop.xlane.xlu0 %307
    %v309 = vsel %vm305, %v298, 0.0
    %310 = vadd.xlane.f32.xlu0 %v309
    %v311 = vpop.xlane.xlu0 %310
    %v312 = vsel %vm305, %v299, 0.0
    %313 = vadd.xlane.f32.xlu0 %v312
    %v314 = vpop.xlane.xlu0 %313
    %v315 = vsel %vm305, %v300, 0.0
    %316 = vadd.xlane.f32.xlu0 %v315
    %v317 = vpop.xlane.xlu0 %316
    %v318 = vsel %vm305, %v301, 0.0
    %319 = vadd.xlane.f32.xlu0 %v318
    %v320 = vpop.xlane.xlu0 %319
    %v321 = vsel %vm305, %v302, 0.0
    %322 = vadd.xlane.f32.xlu0 %v321
    %v323 = vpop.xlane.xlu0 %322
    %v324 = vsel %vm305, %v303, 0.0
    %325 = vadd.xlane.f32.xlu0 %v324
    %v326 = vpop.xlane.xlu0 %325
    %v327 = vsel %vm305, %v304, 0.0
    %328 = vadd.xlane.f32.xlu0 %v327
    %v329 = vpop.xlane.xlu0 %328
    %s330 = smul.u32 0, 8
    %v339 = vlaneseq
    %v340 = vand.u32 %v339, 127
    %v341 = vlaneseq
    %v342 = vshrl.u32 %v341, 7
    %v343 = vsub.s32 %v340, %v342
    %v344 = vrot.slane %v308, %v343
    %v345 = vlaneseq
    %v346 = vshrl.u32 %v345, 7
    %v347 = vsub.s32 %v340, %v346
    %v348 = vrot.slane %v311, %v347
    %v349 = vlaneseq
    %v350 = vshrl.u32 %v349, 7
    %v351 = vsub.s32 %v340, %v350
    %v352 = vrot.slane %v314, %v351
    %v353 = vlaneseq
    %v354 = vshrl.u32 %v353, 7
    %v355 = vsub.s32 %v340, %v354
    %v356 = vrot.slane %v317, %v355
    %v357 = vlaneseq
    %v358 = vshrl.u32 %v357, 7
    %v359 = vsub.s32 %v340, %v358
    %v360 = vrot.slane %v320, %v359
    %v361 = vlaneseq
    %v362 = vshrl.u32 %v361, 7
    %v363 = vsub.s32 %v340, %v362
    %v364 = vrot.slane %v323, %v363
    %v365 = vlaneseq
    %v366 = vshrl.u32 %v365, 7
    %v367 = vsub.s32 %v340, %v366
    %v368 = vrot.slane %v326, %v367
    %v369 = vlaneseq
    %v370 = vshrl.u32 %v369, 7
    %v371 = vsub.s32 %v340, %v370
    %v372 = vrot.slane %v329, %v371
    %vm373 = vcmask 1041409
    %v374 = vsel %vm373, %v348, %v344
    %vm375 = vcmask 1042434
    %v376 = vsel %vm375, %v352, %v374
    %vm377 = vcmask 1043459
    %v378 = vsel %vm377, %v356, %v376
    %vm379 = vcmask 1044484
    %v380 = vsel %vm379, %v360, %v378
    %vm381 = vcmask 1045509
    %v382 = vsel %vm381, %v364, %v380
    %vm383 = vcmask 1046534
    %v384 = vsel %vm383, %v368, %v382
    %vm385 = vcmask 1047559
    %v386 = vsel %vm385, %v372, %v384
    %s388 = scalar_lea.vmem [#allocation3], %s330
    %vm389 = vcmask 64512
    %390 = vst.msk [vmem:[%s388] sm:$0xff] %vm389, %v386
    // Predicated region
    $region34: #{tpu_custom_call.1} parent=1 // pred_check
      %p391 = pneg %p36
    $region35: #{tpu_custom_call.1} parent=1 // pred_check_branch
      %393 = sbr.rel (%p391) target = $region37
    $region36: #{tpu_custom_call.1} parent=1 // pred_region
      %v394 = vld [vmem:[#allocation3] sm:$0xff]
      %v395 = vsel %vm389, %v394, -inf
      %v396 = vrot.slane %v395, 4
      %v397 = vmax.f32 %v395, %v396
      %v398 = vrot.slane %v397, 2
      %v399 = vmax.f32 %v397, %v398
      %v400 = vrot.slane %v399, 1
      %v401 = vmax.f32 %v399, %v400
      %v402 = vsub.f32 %v394, %v401
      %v403 = vmul.f32 %v402, 1.442695
      %v404 = vpow.pop %v403
      %v405 = vsel %vm389, %v404, 0.0
      %v406 = vrot.slane %v405, 4
      %v407 = vadd.f32 %v405, %v406
      %v408 = vrot.slane %v407, 2
      %v409 = vadd.f32 %v407, %v408
      %v410 = vrot.slane %v409, 1
      %v411 = vadd.f32 %v409, %v410
      %v412 = vrcp.pop %v411
      %v413 = vmul.f32 %v404, %v412
      %414 = vxpose.xlu0.b32.start [1/16] %v413, 128
      %415 = vxpose.xlu0.b32.cont [2/16] 0.0, 128
      %416 = vxpose.xlu0.b32.cont [3/16] 0.0, 128
      %417 = vxpose.xlu0.b32.cont [4/16] 0.0, 128
      %418 = vxpose.xlu0.b32.cont [5/16] 0.0, 128
      %419 = vxpose.xlu0.b32.cont [6/16] 0.0, 128
      %420 = vxpose.xlu0.b32.cont [7/16] 0.0, 128
      %421 = vxpose.xlu0.b32.cont [8/16] 0.0, 128
      %422 = vxpose.xlu0.b32.cont [9/16] 0.0, 128
      %423 = vxpose.xlu0.b32.cont [10/16] 0.0, 128
      %424 = vxpose.xlu0.b32.cont [11/16] 0.0, 128
      %425 = vxpose.xlu0.b32.cont [12/16] 0.0, 128
      %426 = vxpose.xlu0.b32.cont [13/16] 0.0, 128
      %427 = vxpose.xlu0.b32.cont [14/16] 0.0, 128
      %428 = vxpose.xlu0.b32.cont [15/16] 0.0, 128
      %429 = vxpose.xlu0.b32.end [16/16] 0.0, 128
      %v430 = vpop.trf.xlu0
      %v431 = vpop.trf.xlu0
      %v432 = vpop.trf.xlu0
      %v433 = vpop.trf.xlu0
      %v434 = vpop.trf.xlu0
      %v435 = vpop.trf.xlu0
      %v436 = vpop.trf.xlu0
      %v437 = vpop.trf.xlu0
      %v438 = vpop.trf.xlu0
      %v439 = vpop.trf.xlu0
      %v440 = vpop.trf.xlu0
      %v441 = vpop.trf.xlu0
      %v442 = vpop.trf.xlu0
      %v443 = vpop.trf.xlu0
      %v444 = vpop.trf.xlu0
      %v445 = vpop.trf.xlu0
      %446 = vst.msk [vmem:[#allocation7] sm:$0xff] %vm389, %v430
    $region37: #{tpu_custom_call.1} parent=1 // pred_fallthru
      _
    // Predicated region
    $region38: #{tpu_custom_call.1} parent=1 // pred_check
      _
    $region39: #{tpu_custom_call.1} parent=1 // pred_check_branch
      %448 = sbr.rel (0) target = $region41
    $region40: #{tpu_custom_call.1} parent=1 // pred_region
      %s450 = ssub.s32 128, 128
      %451 = vsyncadd [#allocation6], %s450
      %s453 = sshll.u32 [#allocation7], 4
      %s454 = int_to_ptr.vmem [resolvable:$true] %s453
      %456 = dma.vmem_to_hbm [thread:$0]  %s454, 128, %s6, [#allocation6]
    $region41: #{tpu_custom_call.1} parent=1 // pred_fallthru
      _
    // Predicated region
    $region42: #{tpu_custom_call.1} parent=1 // pred_check
      _
    $region43: #{tpu_custom_call.1} parent=1 // pred_check_branch
      %458 = sbr.rel (0) target = $region45
    $region44: #{tpu_custom_call.1} parent=1 // pred_region
      %459 = dma.done [#allocation6], 128
    $region45: #{tpu_custom_call.1} parent=1 // pred_fallthru
      _
    %460 = vsyncpa [#allocation5], 1
    %461 = vsyncpa [#allocation6], 1

</llo_original>
